<compile_context>
chip_gen: v5e
topology: v5e:2x2
jax: 0.10.0
libtpu: 0.0.40
codegen_flags: <defaults>
</compile_context>

<pallas_src>
import functools
from math import pi

import jax
import jax.numpy as jnp
from jax import lax
from jax.experimental import pallas as pl
from jax.experimental.pallas import tpu as pltpu

MAX_POISSON_ITERS = 128  # hard safety cap on the Knuth loop (trip count is dynamic)

# int32 views of the uint32 mixing constants (murmur3 fmix32 / golden ratio)
_C_MIX1 = 0x7FEB352D
_C_MIX2 = 0x846CA68B - (1 << 32)
_C_GOLD = 0x9E3779B9 - (1 << 32)
_C_DRAW = 0x632BE59B
_F_ONE_BITS = 0x3F800000  # f32 bit pattern of 1.0


def _shr(x, n):
    """Logical (unsigned) right shift of int32 by a static amount."""
    return lax.shift_right_logical(x, jnp.full(x.shape, n, x.dtype))


def _mix32(x):
    """murmur3 fmix32 finalizer on int32 (wrapping arithmetic, logical shifts)."""
    x = x ^ _shr(x, 16)
    x = x * _C_MIX1
    x = x ^ _shr(x, 15)
    x = x * _C_MIX2
    x = x ^ _shr(x, 16)
    return x


def _bits_to_unit_float(bits):
    """int32 random bits -> uniform f32 in [0,1) via exponent-bitcast (no int->float convert)."""
    mant = _shr(bits, 9)                                  # 23 random mantissa bits, >= 0
    fbits = mant | _F_ONE_BITS                            # [1, 2) when viewed as f32
    return lax.bitcast_convert_type(fbits, jnp.float32) - 1.0


def _noise_kernel(seed_ref, params_ref, x_ref, z_ref, o_ref, *, H, W, L, BN, LP):
    g = pl.program_id(0)
    seed = seed_ref[0]

    # Per-image scalar parameters: one sublane row per image, read as (BN, 1) columns.
    a        = params_ref[:, 0:1]
    b        = params_ref[:, 1:2]
    c        = params_ref[:, 2:3]
    x0       = params_ref[:, 3:4]
    y0       = params_ref[:, 4:5]
    bmin     = params_ref[:, 5:6]
    bmax     = params_ref[:, 6:7]
    baseline = params_ref[:, 7:8]
    bg_std   = params_ref[:, 8:9]

    # ---- NonUniformBg: tilted-Gaussian background, one per image (row) ---------------
    # Flattened (H*W -> lane) pixel index; row/col recovered with float math (exact for
    # images up to ~4M pixels) to avoid integer division on the VPU.
    ji = lax.broadcasted_iota(jnp.int32, (BN, LP), 1)
    jf = ji.astype(jnp.float32)
    row = jnp.floor((jf + 0.5) * (1.0 / W))
    col = jf - row * W
    valid = ji < L                                        # mask lane padding
    yg = row - (H - 1.0) / 2.0                            # Ybg (ogrid rows)
    xg = col - (W - 1.0) / 2.0                            # Xbg (ogrid cols)

    dx = xg - x0
    dy = yg - y0
    q = a * dx * dx + 2.0 * b * dx * dy + c * dy * dy
    h = jnp.exp(-(q * q))
    maxh = jnp.max(jnp.where(valid, h, -jnp.inf), axis=1, keepdims=True)
    h = jnp.where(h < 1e-6 * maxh, 0.0, h)
    minh = jnp.min(jnp.where(valid, h, jnp.inf), axis=1, keepdims=True)
    denom = maxh - minh
    denom = jnp.where(denom > 0.0, denom, 1.0)            # degenerate-background guard
    h = (h - minh) / denom * (bmax - bmin) + bmin

    lam = jnp.maximum(x_ref[...] + h, 0.0)                # Poisson rate (== inputb)
    lam = jnp.where(valid, lam, 0.0)

    # ---- Poisson shot noise: Knuth product-of-uniforms, dynamic trip count -----------
    # Per-element stream id (unique across the whole call), hashed with the draw index.
    gid = (lax.broadcasted_iota(jnp.int32, (BN, LP), 0) + g * BN) * LP + ji
    gid = _mix32(gid ^ seed)

    max_lam = jnp.max(lam)
    n_iters = jnp.minimum(
        jnp.ceil(max_lam + 5.0 * jnp.sqrt(max_lam) + 8.0),
        float(MAX_POISSON_ITERS)).astype(jnp.int32)

    L_exp = jnp.exp(-lam)

    def poisson_body(t, carry):
        prod, k = carry
        kconst = _mix32(seed ^ (t * _C_GOLD + _C_DRAW))   # scalar per-draw key
        u = _bits_to_unit_float(_mix32(gid ^ kconst))     # uniform [0, 1)
        prod = prod * u
        k = jnp.where(prod > L_exp, k + 1.0, k)
        return prod, k

    _, k = lax.fori_loop(jnp.int32(0), n_iters, poisson_body,
                         (jnp.ones((BN, LP), jnp.float32),
                          jnp.zeros((BN, LP), jnp.float32)))

    # ---- ReadNoise (std_nonunif == False path): baseline + sigma_max * N(0,1) --------
    read_noise = baseline + bg_std * z_ref[...]
    o_ref[...] = jnp.maximum(k + read_noise, 0.0)


def noise_layer_forward(x, setup_params, key):
    """JAX/Pallas equivalent of NoiseLayer.forward (nonunif bg + Poisson + read noise)."""
    N, C, H, W = x.shape
    assert C == 1
    L = H * W
    LP = max(128, ((L + 127) // 128) * 128)   # lane-dense flattened width
    BN = min(N, 8)                            # images per grid step
    NP = ((N + BN - 1) // BN) * BN            # padded batch

    offX, offY = setup_params["nonunif_bg_offset"]
    ang_min, ang_max = setup_params["nonunif_bg_theta_range"]
    bmin0, bmax0 = setup_params["nonunif_bg_minvals"]
    sig_min, sig_max = setup_params["read_noise_std_range"]
    bl_min, bl_max = setup_params["read_noise_baseline_range"]

    ks = jax.random.split(key, 10)
    u = lambda k, s=(N,): jax.random.uniform(k, s, jnp.float32)

    # NonUniformBg per-image random parameters (same formulas as the reference)
    x0 = -offX + u(ks[0]) * offX * 2
    y0 = -offY + u(ks[1]) * offY * 2
    sigmax = W / 5 + u(ks[2]) * W / 5
    sigmay = H / 5 + u(ks[3]) * H / 5
    theta = ang_min + u(ks[4]) * (ang_max - ang_min)
    a = jnp.cos(theta) ** 2 / (2 * sigmax**2) + jnp.sin(theta) ** 2 / (2 * sigmay**2)
    b = -jnp.sin(2 * theta) / (4 * sigmax**2) + jnp.sin(2 * theta) / (4 * sigmay**2)
    c = jnp.sin(theta) ** 2 / (2 * sigmax**2) + jnp.cos(theta) ** 2 / (2 * sigmay**2)
    bmin = bmin0 + u(ks[5]) * bmin0 / 2
    bmax = bmax0 + u(ks[6]) * bmax0 / 2

    # ReadNoise parameters (std_nonunif == False path of the reference)
    baseline = jax.random.uniform(ks[7], (), jnp.float32) * (bl_max - bl_min) + bl_min
    bg_std = jnp.float32((sig_max - sig_min) + sig_min)   # == sig_max, as in the reference

    params = jnp.stack(
        [a, b, c, x0, y0, bmin, bmax,
         jnp.full((N,), baseline, jnp.float32),
         jnp.full((N,), bg_std, jnp.float32)], axis=1).astype(jnp.float32)   # (N, 9)
    params = jnp.pad(params, ((0, NP - N), (0, 0)))

    # Fresh per-call Poisson seed derived from `key`; exact N(0,1) read-noise draws.
    seed = jax.random.randint(ks[8], (1,), 0, jnp.iinfo(jnp.int32).max, dtype=jnp.int32)
    z = jax.random.normal(ks[9], (NP, LP), jnp.float32)

    x_flat = x.reshape(N, L).astype(jnp.float32)
    x_flat = jnp.pad(x_flat, ((0, NP - N), (0, LP - L)))

    kernel = functools.partial(_noise_kernel, H=H, W=W, L=L, BN=BN, LP=LP)
    out = pl.pallas_call(
        kernel,
        out_shape=jax.ShapeDtypeStruct((NP, LP), jnp.float32),
        grid=(NP // BN,),
        in_specs=[
            pl.BlockSpec(memory_space=pltpu.MemorySpace.SMEM),   # seed (1,) int32
            pl.BlockSpec((BN, 9), lambda g: (g, 0)),             # per-image scalar params
            pl.BlockSpec((BN, LP), lambda g: (g, 0)),            # input images (flattened)
            pl.BlockSpec((BN, LP), lambda g: (g, 0)),            # N(0,1) read-noise draws
        ],
        out_specs=pl.BlockSpec((BN, LP), lambda g: (g, 0)),
        compiler_params=pltpu.CompilerParams(
            dimension_semantics=("parallel",)),  # independent images -> both TCs on v7x
    )(seed, params, x_flat, z)

    return out[:N, :L].reshape(N, 1, H, W)


if __name__ == "__main__":
    key = jax.random.PRNGKey(0)
    k_in, k_par = jax.random.split(key)

    N, C, H, W = 2, 1, 16, 16
    setup_params = {
        "batch_size_gen": N,
        "H": H,
        "W": W,
        "nonunif_bg_flag": True,
        "nonunif_bg_offset": [1.0, 1.0],
        "nonunif_bg_theta_range": [0.0, pi / 2],
        "nonunif_bg_minvals": [0.5, 2.0],
        "read_noise_flag": True,
        "read_noise_nonuinf": False,
        "read_noise_std_range": [0.5, 1.5],
        "read_noise_baseline_range": [1.0, 3.0],
    }

    x = jax.random.uniform(k_in, (N, C, H, W), jnp.float32, 0.0, 5.0)

    out = jax.block_until_ready(noise_layer_forward(x, setup_params, k_par))

    assert out.shape == (N, C, H, W)
    assert out.dtype == jnp.float32
    assert bool(jnp.all(out >= 0.0))            # clamped at zero like torch.max(..., 0)
    assert bool(jnp.all(jnp.isfinite(out)))
    mean_out = float(jnp.mean(out))
    assert 0.5 < mean_out < 30.0                # loose sanity band: ~E[lam] + baseline
    print("KERNEL_OK")
</pallas_src>

<mosaic_0001>
module attributes {stable_mosaic.version = 11 : i64} {
  func.func @_noise_kernel(%arg0: i32, %arg1: memref<1xi32, #tpu.memory_space<smem>>, %arg2: memref<2x9xf32, #tpu.memory_space<vmem>>, %arg3: memref<2x256xf32, #tpu.memory_space<vmem>>, %arg4: memref<2x256xf32, #tpu.memory_space<vmem>>, %arg5: memref<2x256xf32, #tpu.memory_space<vmem>>) attributes {dimension_semantics = [#tpu.dimension_semantics<parallel>], iteration_bounds = array<i64: 1>, scalar_prefetch = 0 : i64, scratch_operands = 0 : i64, tpu.core_type = #tpu.core_type<tc>, window_params = [{transform_indices = @transform_0, window_bounds = array<i64: 1>}, {transform_indices = @transform_1, window_bounds = array<i64: 2, 9>}, {transform_indices = @transform_2, window_bounds = array<i64: 2, 256>}, {transform_indices = @transform_3, window_bounds = array<i64: 2, 256>}, {transform_indices = @transform_4, window_bounds = array<i64: 2, 256>}]} {
    %c0 = arith.constant 0 : index
    %0 = memref.load %arg1[%c0] : memref<1xi32, #tpu.memory_space<smem>>
    %c0_0 = arith.constant 0 : index
    %c0_1 = arith.constant 0 : index
    %1 = vector.load %arg2[%c0_0, %c0_1] : memref<2x9xf32, #tpu.memory_space<vmem>>, vector<2x1xf32>
    %c0_2 = arith.constant 0 : index
    %c1 = arith.constant 1 : index
    %2 = vector.load %arg2[%c0_2, %c1] : memref<2x9xf32, #tpu.memory_space<vmem>>, vector<2x1xf32>
    %c0_3 = arith.constant 0 : index
    %c2 = arith.constant 2 : index
    %3 = vector.load %arg2[%c0_3, %c2] : memref<2x9xf32, #tpu.memory_space<vmem>>, vector<2x1xf32>
    %c0_4 = arith.constant 0 : index
    %c3 = arith.constant 3 : index
    %4 = vector.load %arg2[%c0_4, %c3] : memref<2x9xf32, #tpu.memory_space<vmem>>, vector<2x1xf32>
    %c0_5 = arith.constant 0 : index
    %c4 = arith.constant 4 : index
    %5 = vector.load %arg2[%c0_5, %c4] : memref<2x9xf32, #tpu.memory_space<vmem>>, vector<2x1xf32>
    %c0_6 = arith.constant 0 : index
    %c5 = arith.constant 5 : index
    %6 = vector.load %arg2[%c0_6, %c5] : memref<2x9xf32, #tpu.memory_space<vmem>>, vector<2x1xf32>
    %c0_7 = arith.constant 0 : index
    %c6 = arith.constant 6 : index
    %7 = vector.load %arg2[%c0_7, %c6] : memref<2x9xf32, #tpu.memory_space<vmem>>, vector<2x1xf32>
    %c0_8 = arith.constant 0 : index
    %c7 = arith.constant 7 : index
    %8 = vector.load %arg2[%c0_8, %c7] : memref<2x9xf32, #tpu.memory_space<vmem>>, vector<2x1xf32>
    %c0_9 = arith.constant 0 : index
    %c8 = arith.constant 8 : index
    %9 = vector.load %arg2[%c0_9, %c8] : memref<2x9xf32, #tpu.memory_space<vmem>>, vector<2x1xf32>
    %10 = tpu.iota {dimensions = array<i32: 1>} : vector<2x256xi32>
    %11 = arith.sitofp %10 : vector<2x256xi32> to vector<2x256xf32>
    %cst = arith.constant 5.000000e-01 : f32
    %12 = vector.broadcast %cst : f32 to vector<2x256xf32>
    %13 = arith.addf %11, %12 : vector<2x256xf32>
    %cst_10 = arith.constant 6.250000e-02 : f32
    %14 = vector.broadcast %cst_10 : f32 to vector<2x256xf32>
    %15 = arith.mulf %13, %14 : vector<2x256xf32>
    %16 = math.floor %15 : vector<2x256xf32>
    %cst_11 = arith.constant 1.600000e+01 : f32
    %17 = vector.broadcast %cst_11 : f32 to vector<2x256xf32>
    %18 = arith.mulf %16, %17 : vector<2x256xf32>
    %19 = arith.subf %11, %18 : vector<2x256xf32>
    %c256_i32 = arith.constant 256 : i32
    %20 = vector.broadcast %c256_i32 : i32 to vector<2x256xi32>
    %21 = arith.cmpi slt, %10, %20 : vector<2x256xi32>
    %cst_12 = arith.constant 7.500000e+00 : f32
    %22 = vector.broadcast %cst_12 : f32 to vector<2x256xf32>
    %23 = arith.subf %16, %22 : vector<2x256xf32>
    %cst_13 = arith.constant 7.500000e+00 : f32
    %24 = vector.broadcast %cst_13 : f32 to vector<2x256xf32>
    %25 = arith.subf %19, %24 : vector<2x256xf32>
    %26 = vector.broadcast %4 : vector<2x1xf32> to vector<2x256xf32>
    %27 = arith.subf %25, %26 : vector<2x256xf32>
    %28 = vector.broadcast %5 : vector<2x1xf32> to vector<2x256xf32>
    %29 = arith.subf %23, %28 : vector<2x256xf32>
    %30 = vector.broadcast %1 : vector<2x1xf32> to vector<2x256xf32>
    %31 = arith.mulf %30, %27 : vector<2x256xf32>
    %32 = arith.mulf %31, %27 : vector<2x256xf32>
    %cst_14 = arith.constant 2.000000e+00 : f32
    %33 = vector.broadcast %cst_14 : f32 to vector<2x1xf32>
    %34 = arith.mulf %33, %2 : vector<2x1xf32>
    %35 = vector.broadcast %34 : vector<2x1xf32> to vector<2x256xf32>
    %36 = arith.mulf %35, %27 : vector<2x256xf32>
    %37 = arith.mulf %36, %29 : vector<2x256xf32>
    %38 = arith.addf %32, %37 : vector<2x256xf32>
    %39 = vector.broadcast %3 : vector<2x1xf32> to vector<2x256xf32>
    %40 = arith.mulf %39, %29 : vector<2x256xf32>
    %41 = arith.mulf %40, %29 : vector<2x256xf32>
    %42 = arith.addf %38, %41 : vector<2x256xf32>
    %43 = arith.mulf %42, %42 : vector<2x256xf32>
    %cst_15 = arith.constant 0.000000e+00 : f32
    %44 = vector.broadcast %cst_15 : f32 to vector<2x256xf32>
    %45 = arith.subf %44, %43 : vector<2x256xf32>
    %46 = math.exp %45 : vector<2x256xf32>
    %cst_16 = arith.constant 0xFF800000 : f32
    %47 = vector.broadcast %cst_16 : f32 to vector<2x256xf32>
    %48 = arith.select %21, %46, %47 : vector<2x256xi1>, vector<2x256xf32>
    %cst_17 = arith.constant dense<0xFF800000> : vector<2xf32>
    %49 = vector.multi_reduction <maximumf>, %48, %cst_17 [1] : vector<2x256xf32> to vector<2xf32>
    %50 = vector.shape_cast %49 : vector<2xf32> to vector<2x1xf32>
    %cst_18 = arith.constant 9.99999997E-7 : f32
    %51 = vector.broadcast %cst_18 : f32 to vector<2x1xf32>
    %52 = arith.mulf %51, %50 : vector<2x1xf32>
    %53 = vector.broadcast %52 : vector<2x1xf32> to vector<2x256xf32>
    %54 = arith.cmpf olt, %46, %53 : vector<2x256xf32>
    %cst_19 = arith.constant 0.000000e+00 : f32
    %55 = vector.broadcast %cst_19 : f32 to vector<2x256xf32>
    %56 = arith.select %54, %55, %46 : vector<2x256xi1>, vector<2x256xf32>
    %cst_20 = arith.constant 0x7F800000 : f32
    %57 = vector.broadcast %cst_20 : f32 to vector<2x256xf32>
    %58 = arith.select %21, %56, %57 : vector<2x256xi1>, vector<2x256xf32>
    %cst_21 = arith.constant dense<0x7F800000> : vector<2xf32>
    %59 = vector.multi_reduction <minimumf>, %58, %cst_21 [1] : vector<2x256xf32> to vector<2xf32>
    %60 = vector.shape_cast %59 : vector<2xf32> to vector<2x1xf32>
    %61 = arith.subf %50, %60 : vector<2x1xf32>
    %cst_22 = arith.constant 0.000000e+00 : f32
    %62 = vector.broadcast %cst_22 : f32 to vector<2x1xf32>
    %63 = arith.cmpf ogt, %61, %62 : vector<2x1xf32>
    %cst_23 = arith.constant 1.000000e+00 : f32
    %64 = vector.broadcast %cst_23 : f32 to vector<2x1xf32>
    %65 = arith.select %63, %61, %64 : vector<2x1xi1>, vector<2x1xf32>
    %66 = vector.broadcast %60 : vector<2x1xf32> to vector<2x256xf32>
    %67 = arith.subf %56, %66 : vector<2x256xf32>
    %68 = vector.broadcast %65 : vector<2x1xf32> to vector<2x256xf32>
    %69 = arith.divf %67, %68 : vector<2x256xf32>
    %70 = arith.subf %7, %6 : vector<2x1xf32>
    %71 = vector.broadcast %70 : vector<2x1xf32> to vector<2x256xf32>
    %72 = arith.mulf %69, %71 : vector<2x256xf32>
    %73 = vector.broadcast %6 : vector<2x1xf32> to vector<2x256xf32>
    %74 = arith.addf %72, %73 : vector<2x256xf32>
    %c0_24 = arith.constant 0 : index
    %c0_25 = arith.constant 0 : index
    %75 = vector.load %arg3[%c0_24, %c0_25] : memref<2x256xf32, #tpu.memory_space<vmem>>, vector<2x256xf32>
    %76 = arith.addf %75, %74 : vector<2x256xf32>
    %cst_26 = arith.constant 0.000000e+00 : f32
    %77 = vector.broadcast %cst_26 : f32 to vector<2x256xf32>
    %78 = arith.maximumf %76, %77 : vector<2x256xf32>
    %cst_27 = arith.constant 0.000000e+00 : f32
    %79 = vector.broadcast %cst_27 : f32 to vector<2x256xf32>
    %80 = arith.select %21, %78, %79 : vector<2x256xi1>, vector<2x256xf32>
    %81 = tpu.iota {dimensions = array<i32: 0>} : vector<2x256xi32>
    %c2_i32 = arith.constant 2 : i32
    %82 = arith.muli %arg0, %c2_i32 : i32
    %83 = vector.broadcast %82 : i32 to vector<2x256xi32>
    %84 = arith.addi %81, %83 : vector<2x256xi32>
    %c256_i32_28 = arith.constant 256 : i32
    %85 = vector.broadcast %c256_i32_28 : i32 to vector<2x256xi32>
    %86 = arith.muli %84, %85 : vector<2x256xi32>
    %87 = arith.addi %86, %10 : vector<2x256xi32>
    %88 = vector.broadcast %0 : i32 to vector<2x256xi32>
    %89 = arith.xori %87, %88 : vector<2x256xi32>
    %c16_i32 = arith.constant 16 : i32
    %90 = vector.broadcast %c16_i32 : i32 to vector<2x256xi32>
    %91 = arith.shrui %89, %90 : vector<2x256xi32>
    %92 = arith.xori %89, %91 : vector<2x256xi32>
    %c2146121005_i32 = arith.constant 2146121005 : i32
    %93 = vector.broadcast %c2146121005_i32 : i32 to vector<2x256xi32>
    %94 = arith.muli %92, %93 : vector<2x256xi32>
    %c15_i32 = arith.constant 15 : i32
    %95 = vector.broadcast %c15_i32 : i32 to vector<2x256xi32>
    %96 = arith.shrui %94, %95 : vector<2x256xi32>
    %97 = arith.xori %94, %96 : vector<2x256xi32>
    %c-2073254261_i32 = arith.constant -2073254261 : i32
    %98 = vector.broadcast %c-2073254261_i32 : i32 to vector<2x256xi32>
    %99 = arith.muli %97, %98 : vector<2x256xi32>
    %c16_i32_29 = arith.constant 16 : i32
    %100 = vector.broadcast %c16_i32_29 : i32 to vector<2x256xi32>
    %101 = arith.shrui %99, %100 : vector<2x256xi32>
    %102 = arith.xori %99, %101 : vector<2x256xi32>
    %103 = vector.shape_cast %80 : vector<2x256xf32> to vector<1x2x256xf32>
    %cst_30 = arith.constant dense<0xFF800000> : vector<1xf32>
    %104 = vector.multi_reduction <maximumf>, %103, %cst_30 [1, 2] : vector<1x2x256xf32> to vector<1xf32>
    %105 = vector.shape_cast %104 : vector<1xf32> to vector<1x1x1xf32>
    %106 = vector.extract %105[0, 0, 0] : f32 from vector<1x1x1xf32>
    %107 = math.sqrt %106 : f32
    %cst_31 = arith.constant 5.000000e+00 : f32
    %108 = arith.mulf %cst_31, %107 : f32
    %109 = arith.addf %106, %108 : f32
    %cst_32 = arith.constant 8.000000e+00 : f32
    %110 = arith.addf %109, %cst_32 : f32
    %111 = math.ceil %110 : f32
    %cst_33 = arith.constant 1.280000e+02 : f32
    %112 = arith.minimumf %111, %cst_33 : f32
    %113 = arith.fptosi %112 : f32 to i32
    %cst_34 = arith.constant 0.000000e+00 : f32
    %114 = vector.broadcast %cst_34 : f32 to vector<2x256xf32>
    %115 = arith.subf %114, %80 : vector<2x256xf32>
    %116 = math.exp %115 : vector<2x256xf32>
    %cst_35 = arith.constant 1.000000e+00 : f32
    %117 = vector.broadcast %cst_35 : f32 to vector<2x256xf32>
    %cst_36 = arith.constant 0.000000e+00 : f32
    %118 = vector.broadcast %cst_36 : f32 to vector<2x256xf32>
    %c0_i32 = arith.constant 0 : i32
    %119 = arith.subi %113, %c0_i32 : i32
    %120 = arith.addi %c0_i32, %119 : i32
    %c1_i32 = arith.constant 1 : i32
    %121:2 = scf.for %arg6 = %c0_i32 to %120 step %c1_i32 iter_args(%arg7 = %117, %arg8 = %118) -> (vector<2x256xf32>, vector<2x256xf32>)  : i32 {
      %c-1640531527_i32 = arith.constant -1640531527 : i32
      %131 = arith.muli %arg6, %c-1640531527_i32 : i32
      %c1663821211_i32 = arith.constant 1663821211 : i32
      %132 = arith.addi %131, %c1663821211_i32 : i32
      %133 = arith.xori %0, %132 : i32
      %c16_i32_42 = arith.constant 16 : i32
      %134 = arith.shrui %133, %c16_i32_42 : i32
      %135 = arith.xori %133, %134 : i32
      %c2146121005_i32_43 = arith.constant 2146121005 : i32
      %136 = arith.muli %135, %c2146121005_i32_43 : i32
      %c15_i32_44 = arith.constant 15 : i32
      %137 = arith.shrui %136, %c15_i32_44 : i32
      %138 = arith.xori %136, %137 : i32
      %c-2073254261_i32_45 = arith.constant -2073254261 : i32
      %139 = arith.muli %138, %c-2073254261_i32_45 : i32
      %c16_i32_46 = arith.constant 16 : i32
      %140 = arith.shrui %139, %c16_i32_46 : i32
      %141 = arith.xori %139, %140 : i32
      %142 = vector.broadcast %141 : i32 to vector<2x256xi32>
      %143 = arith.xori %102, %142 : vector<2x256xi32>
      %c16_i32_47 = arith.constant 16 : i32
      %144 = vector.broadcast %c16_i32_47 : i32 to vector<2x256xi32>
      %145 = arith.shrui %143, %144 : vector<2x256xi32>
      %146 = arith.xori %143, %145 : vector<2x256xi32>
      %c2146121005_i32_48 = arith.constant 2146121005 : i32
      %147 = vector.broadcast %c2146121005_i32_48 : i32 to vector<2x256xi32>
      %148 = arith.muli %146, %147 : vector<2x256xi32>
      %c15_i32_49 = arith.constant 15 : i32
      %149 = vector.broadcast %c15_i32_49 : i32 to vector<2x256xi32>
      %150 = arith.shrui %148, %149 : vector<2x256xi32>
      %151 = arith.xori %148, %150 : vector<2x256xi32>
      %c-2073254261_i32_50 = arith.constant -2073254261 : i32
      %152 = vector.broadcast %c-2073254261_i32_50 : i32 to vector<2x256xi32>
      %153 = arith.muli %151, %152 : vector<2x256xi32>
      %c16_i32_51 = arith.constant 16 : i32
      %154 = vector.broadcast %c16_i32_51 : i32 to vector<2x256xi32>
      %155 = arith.shrui %153, %154 : vector<2x256xi32>
      %156 = arith.xori %153, %155 : vector<2x256xi32>
      %c9_i32 = arith.constant 9 : i32
      %157 = vector.broadcast %c9_i32 : i32 to vector<2x256xi32>
      %158 = arith.shrui %156, %157 : vector<2x256xi32>
      %c1065353216_i32 = arith.constant 1065353216 : i32
      %159 = vector.broadcast %c1065353216_i32 : i32 to vector<2x256xi32>
      %160 = arith.ori %158, %159 : vector<2x256xi32>
      %161 = tpu.bitcast %160 : vector<2x256xi32> -> vector<2x256xf32>
      %cst_52 = arith.constant 1.000000e+00 : f32
      %162 = vector.broadcast %cst_52 : f32 to vector<2x256xf32>
      %163 = arith.subf %161, %162 : vector<2x256xf32>
      %164 = arith.mulf %arg7, %163 : vector<2x256xf32>
      %165 = arith.cmpf ogt, %164, %116 : vector<2x256xf32>
      %cst_53 = arith.constant 1.000000e+00 : f32
      %166 = vector.broadcast %cst_53 : f32 to vector<2x256xf32>
      %167 = arith.addf %arg8, %166 : vector<2x256xf32>
      %168 = arith.select %165, %167, %arg8 : vector<2x256xi1>, vector<2x256xf32>
      scf.yield %164, %168 : vector<2x256xf32>, vector<2x256xf32>
    }
    %c0_37 = arith.constant 0 : index
    %c0_38 = arith.constant 0 : index
    %122 = vector.load %arg4[%c0_37, %c0_38] : memref<2x256xf32, #tpu.memory_space<vmem>>, vector<2x256xf32>
    %123 = vector.broadcast %9 : vector<2x1xf32> to vector<2x256xf32>
    %124 = arith.mulf %123, %122 : vector<2x256xf32>
    %125 = vector.broadcast %8 : vector<2x1xf32> to vector<2x256xf32>
    %126 = arith.addf %125, %124 : vector<2x256xf32>
    %127 = arith.addf %121#1, %126 : vector<2x256xf32>
    %cst_39 = arith.constant 0.000000e+00 : f32
    %128 = vector.broadcast %cst_39 : f32 to vector<2x256xf32>
    %129 = arith.maximumf %127, %128 : vector<2x256xf32>
    %c0_40 = arith.constant 0 : index
    %c0_41 = arith.constant 0 : index
    %130 = vector.load %arg5[%c0_40, %c0_41] : memref<2x256xf32, #tpu.memory_space<vmem>>, vector<2x256xf32>
    tpu.vector_store %arg5[%c0_40, %c0_41], %129 {strides = array<i32>} : memref<2x256xf32, #tpu.memory_space<vmem>>, vector<2x256xf32>,
    return
  }
  func.func @transform_0(%arg0: i32) -> i32 {
    %c0_i32 = arith.constant 0 : i32
    %c0_i32_0 = arith.constant 0 : i32
    return %c0_i32 : i32
  }
  func.func @transform_1(%arg0: i32) -> (i32, i32) {
    %c0_i32 = arith.constant 0 : i32
    %c0_i32_0 = arith.constant 0 : i32
    return %arg0, %c0_i32 : i32, i32
  }
  func.func @transform_2(%arg0: i32) -> (i32, i32) {
    %c0_i32 = arith.constant 0 : i32
    %c0_i32_0 = arith.constant 0 : i32
    return %arg0, %c0_i32 : i32, i32
  }
  func.func @transform_3(%arg0: i32) -> (i32, i32) {
    %c0_i32 = arith.constant 0 : i32
    %c0_i32_0 = arith.constant 0 : i32
    return %arg0, %c0_i32 : i32, i32
  }
  func.func @transform_4(%arg0: i32) -> (i32, i32) {
    %c0_i32 = arith.constant 0 : i32
    %c0_i32_0 = arith.constant 0 : i32
    return %arg0, %c0_i32 : i32, i32
  }
}

</mosaic_0001>

<llo_original>
// kernel: tpu_custom_call.1
$region0: #{tpu_custom_call.1}
  #allocation0 [shape = 'u32[]', space=smem, size = 0x4, offset = 0x4, fixed_abs, tag = 'smem constant byte address 0x4 - core index']
  #allocation1 [shape = 'u32[72,128]{1,0:T(1,128)}', space=vmem, size = 0x9000, scoped, tag = 'internal scratch']
  #allocation2 [shape = 's32[1]{0:T(128)S(6)}', space=smem, size = 0x200, scoped, tag = 'scoped memory for tpu_custom_call.1']
  %s0 = inlined_call_operand.<no memory space> [shape: s32[1], index: 0, kind: input, shape index: {}]
  %s1 = inlined_call_operand.vmem [shape: f32[2,9], index: 1, kind: input, shape index: {}]
  %s2 = inlined_call_operand.hbm [shape: f32[2,256], index: 2, kind: input, shape index: {}]
  %s3 = inlined_call_operand.hbm [shape: f32[2,256], index: 3, kind: input, shape index: {}]
  %s4 = inlined_call_operand.hbm [shape: f32[2,256], index: 4, kind: output, shape index: {}]
  %s5 = sld [smem:[#allocation0]]
  $region41: #{tpu_custom_call.1} parent=0
    _
  %s7 = ssub.s32 1, %s5
  %s8 = scalar_select 0, %s7, %s5
  %9 = sst [smem:[#allocation2]] %s0
  $region1: #{tpu_custom_call.1} parent=0
    #allocation3 [shape = 'u8[2048]{0}', space=vmem, size = 0x800, scoped, tag = 'input window, operand 2, single buffered']
    #allocation4 [shape = 's32[1]{0}', space=sflag, size = 0x4, scoped, tag = 'scoped memory for tpu_custom_call.1']
    #allocation5 [shape = 's32[1]{0}', space=sflag, size = 0x4, scoped, tag = 'scoped memory for tpu_custom_call.1']
    #allocation6 [shape = 'u8[2048]{0}', space=vmem, size = 0x800, scoped, tag = 'input window, operand 3, single buffered']
    #allocation7 [shape = 's32[1]{0}', space=sflag, size = 0x4, scoped, tag = 'scoped memory for tpu_custom_call.1']
    #allocation8 [shape = 'u8[2048]{0}', space=vmem, size = 0x800, scoped, tag = 'output window, operand 0, single buffered']
    %10 = vsyncpa [#allocation4], 0
    %11 = vsyncpa [#allocation7], 0
    %12 = vsyncpa [#allocation5], 0
    // Predicated region
    $region2: #{tpu_custom_call.1} parent=1 // pred_check
      _
    $region3: #{tpu_custom_call.1} parent=1 // pred_check_branch
      %14 = sbr.rel (0) target = $region5
    $region4: #{tpu_custom_call.1} parent=1 // pred_region
      _
    $region5: #{tpu_custom_call.1} parent=1 // pred_fallthru
      _
    // Predicated region
    $region6: #{tpu_custom_call.1} parent=1 // pred_check
      _
    $region7: #{tpu_custom_call.1} parent=1 // pred_check_branch
      %16 = sbr.rel (0) target = $region9
    $region8: #{tpu_custom_call.1} parent=1 // pred_region
      _
    $region9: #{tpu_custom_call.1} parent=1 // pred_fallthru
      _
    // Predicated region
    $region10: #{tpu_custom_call.1} parent=1 // pred_check
      _
    $region11: #{tpu_custom_call.1} parent=1 // pred_check_branch
      %18 = sbr.rel (0) target = $region13
    $region12: #{tpu_custom_call.1} parent=1 // pred_region
      %20 = vsyncadd [#allocation4], 0
      %s22 = sshll.u32 %s2, 4
      %s23 = int_to_ptr.hbm [resolvable:$true] %s22
      %s24 = sshll.u32 [#allocation3], 4
      %s25 = int_to_ptr.vmem [resolvable:$true] %s24
      %27 = dma.hbm_to_vmem [thread:$0]  %s23, 64, %s25, [#allocation4]
    $region13: #{tpu_custom_call.1} parent=1 // pred_fallthru
      _
    // Predicated region
    $region14: #{tpu_custom_call.1} parent=1 // pred_check
      _
    $region15: #{tpu_custom_call.1} parent=1 // pred_check_branch
      %29 = sbr.rel (0) target = $region17
    $region16: #{tpu_custom_call.1} parent=1 // pred_region
      %31 = vsyncadd [#allocation7], 0
      %s33 = sshll.u32 %s3, 4
      %s34 = int_to_ptr.hbm [resolvable:$true] %s33
      %s35 = sshll.u32 [#allocation6], 4
      %s36 = int_to_ptr.vmem [resolvable:$true] %s35
      %38 = dma.hbm_to_vmem [thread:$0]  %s34, 64, %s36, [#allocation7]
    $region17: #{tpu_custom_call.1} parent=1 // pred_fallthru
      _
    // Predicated region
    $region18: #{tpu_custom_call.1} parent=1 // pred_check
      _
    $region19: #{tpu_custom_call.1} parent=1 // pred_check_branch
      %40 = sbr.rel (0) target = $region21
    $region20: #{tpu_custom_call.1} parent=1 // pred_region
      %42 = dma.done [#allocation4], 64
    $region21: #{tpu_custom_call.1} parent=1 // pred_fallthru
      _
    // Predicated region
    $region22: #{tpu_custom_call.1} parent=1 // pred_check
      _
    $region23: #{tpu_custom_call.1} parent=1 // pred_check_branch
      %44 = sbr.rel (0) target = $region25
    $region24: #{tpu_custom_call.1} parent=1 // pred_region
      %46 = dma.done [#allocation7], 64
    $region25: #{tpu_custom_call.1} parent=1 // pred_fallthru
      _
    %s47 = sld [smem:[#allocation2]]
    %v48 = vld [vmem:[%s1] sm:$0x3]
    %v49 = vlaneseq
    %v50 = vand.u32 %v49, 127
    %v51 = vadd.s32 %v50, 128
    %v52 = vcvt.s32.f32 %v50
    %v53 = vcvt.s32.f32 %v51
    %v54 = vadd.f32 %v52, 0.5
    %v55 = vadd.f32 %v53, 0.5
    %v56 = vmul.f32 %v54, 0.0625
    %v57 = vmul.f32 %v55, 0.0625
    %v58 = vfloor.f32 %v56
    %v59 = vfloor.f32 %v57
    %v60 = vmul.f32 %v58, 16.0
    %v61 = vmul.f32 %v59, 16.0
    %v62 = vsub.f32 %v52, %v60
    %v63 = vsub.f32 %v53, %v61
    %vm64 = vcmp.lt.s32.totalorder %v50, 256
    %vm65 = vcmp.lt.s32.totalorder %v51, 256
    %v66 = vsub.f32 %v58, 7.5
    %v67 = vsub.f32 %v59, 7.5
    %v68 = vsub.f32 %v62, 7.5
    %v69 = vsub.f32 %v63, 7.5
    %71 = vset.pattern.permute.xlu0 3
    %72 = vperm.xlu0 %71, %v48
    %v73 = vpop.permute.xlu0 %72
    %v75 = vsub.f32 %v68, %v73
    %v76 = vsub.f32 %v69, %v73
    %77 = vset.pattern.permute.xlu0 4
    %78 = vperm.xlu0 %77, %v48
    %v79 = vpop.permute.xlu0 %78
    %v81 = vsub.f32 %v66, %v79
    %v82 = vsub.f32 %v67, %v79
    %83 = vset.pattern.permute.xlu0 0
    %84 = vperm.xlu0 %83, %v48
    %v85 = vpop.permute.xlu0 %84
    %v87 = vmul.f32 %v85, %v75
    %v88 = vmul.f32 %v85, %v76
    %v89 = vmul.f32 %v87, %v75
    %v90 = vmul.f32 %v88, %v76
    %v91 = vmul.f32 %v48, 2.0
    %93 = vset.pattern.permute.xlu0 1
    %94 = vperm.xlu0 %93, %v91
    %v95 = vpop.permute.xlu0 %94
    %v97 = vmul.f32 %v95, %v75
    %v98 = vmul.f32 %v95, %v76
    %v99 = vmul.f32 %v97, %v81
    %v100 = vmul.f32 %v98, %v82
    %v101 = vadd.f32 %v89, %v99
    %v102 = vadd.f32 %v90, %v100
    %103 = vset.pattern.permute.xlu0 2
    %104 = vperm.xlu0 %103, %v48
    %v105 = vpop.permute.xlu0 %104
    %v107 = vmul.f32 %v105, %v81
    %v108 = vmul.f32 %v105, %v82
    %v109 = vmul.f32 %v107, %v81
    %v110 = vmul.f32 %v108, %v82
    %v111 = vadd.f32 %v101, %v109
    %v112 = vadd.f32 %v102, %v110
    %v113 = vmul.f32 %v111, %v111
    %v114 = vmul.f32 %v112, %v112
    %v115 = vsub.f32 0.0, %v113
    %v116 = vsub.f32 0.0, %v114
    %v117 = vmul.f32 %v115, 1.442695
    %v118 = vpow.pop %v117
    %v119 = vmul.f32 %v116, 1.442695
    %v120 = vpow.pop %v119
    %v121 = vsel %vm64, %v118, -inf
    %v122 = vsel %vm65, %v120, -inf
    %vm123 = vcmask 1041408
    %v124 = vsel %vm123, %v121, -inf
    %v125 = vsel %vm123, %v122, -inf
    %v126 = vmax.f32 %v124, %v125
    %127 = vmax.xlane.f32.xlu0 %v126
    %v128 = vpop.xlane.xlu0 %127
    %v129 = vmul.f32 %v128, 1e-06
    %vm130 = vcmp.lt.f32.partialorder %v118, %v129
    %vm131 = vcmp.lt.f32.partialorder %v120, %v129
    %v132 = vsel %vm130, 0.0, %v118
    %v133 = vsel %vm131, 0.0, %v120
    %v134 = vsel %vm64, %v132, inf
    %v135 = vsel %vm65, %v133, inf
    %v136 = vsel %vm123, %v134, inf
    %v137 = vsel %vm123, %v135, inf
    %v138 = vmin.f32 %v136, %v137
    %139 = vmin.xlane.f32.xlu0 %v138
    %v140 = vpop.xlane.xlu0 %139
    %v141 = vsub.f32 %v128, %v140
    %vm142 = vcmp.gt.f32.partialorder %v141, 0.0
    %v143 = vsel %vm142, %v141, 1.0
    %v144 = vsub.f32 %v132, %v140
    %v145 = vsub.f32 %v133, %v140
    %v146 = vrcp.pop %v143
    %v147 = vmul.f32 %v143, %v146
    %v148 = vsub.f32 1.0, %v147
    %v149 = vmul.f32 %v146, %v148
    %v150 = vadd.f32 %v146, %v149
    %vm151 = vweird.f32 %v143
    %vm152 = vweird.f32 %v146
    %vm153 = vmor %vm151, %vm152
    %v154 = vsel %vm153, %v146, %v150
    %v155 = vand.u32 2147483647, %v143
    %vm156 = vcmp.eq.f32.partialorder %v155, 8.507059e+37
    %v157 = vand.u32 %v143, 2147483648
    %v158 = vor.u32 1.1754944e-38, %v157
    %v159 = vsel %vm156, %v158, %v154
    %v160 = vmul.f32 %v144, %v159
    %v161 = vmul.f32 %v145, %v159
    %162 = vrot.lane.b32.xlu0 %v48, 1
    %v163 = vpop.permute.xlu0 %162
    %v165 = vsub.f32 %v48, %v163
    %167 = vset.pattern.permute.xlu0 6
    %168 = vperm.xlu0 %167, %v165
    %v169 = vpop.permute.xlu0 %168
    %v171 = vmul.f32 %v160, %v169
    %v172 = vmul.f32 %v161, %v169
    %173 = vset.pattern.permute.xlu0 5
    %174 = vperm.xlu0 %173, %v48
    %v175 = vpop.permute.xlu0 %174
    %v177 = vadd.f32 %v171, %v175
    %v178 = vadd.f32 %v172, %v175
    %v179 = vld [vmem:[#allocation3] sm:$0xf]
    %v182 = vrot.slane %v178, 6
    %v183 = vsel %vm123, %v177, %v182
    %v185 = vadd.f32 %v179, %v183
    %v186 = vmax.f32 %v185, 0.0
    %188 = vst [vmem:[#allocation1] ss:$4 sm:$0xff] %v186
    %v189 = vld.sshfl [vmem:[#allocation1] sm:$0xff pattern:$0x73625140]
    %v190 = vld.sshfl [vmem:[#allocation1 + $0x8] sm:$0xff pattern:$0x73625140]
    %v193 = vsel %vm64, %v189, 0.0
    %v194 = vsel %vm65, %v190, 0.0
    %v195 = vlaneseq
    %v196 = vshrl.u32 %v195, 7
    %s197 = smul.u32 0, 2
    %v198 = vstv %s197
    %v199 = vadd.s32 %v196, %v198
    %v200 = vmul.u32 %v199, 256
    %v201 = vadd.s32 %v200, %v50
    %v202 = vadd.s32 %v200, %v51
    %v203 = vstv %s47
    %v204 = vxor.u32 %v201, %v203
    %v205 = vxor.u32 %v202, %v203
    %v206 = vshrl.u32 %v204, 16
    %v207 = vshrl.u32 %v205, 16
    %v208 = vxor.u32 %v204, %v206
    %v209 = vxor.u32 %v205, %v207
    %v210 = vmul.u32 %v208, 2146121005
    %v211 = vmul.u32 %v209, 2146121005
    %v212 = vshrl.u32 %v210, 15
    %v213 = vshrl.u32 %v211, 15
    %v214 = vxor.u32 %v210, %v212
    %v215 = vxor.u32 %v211, %v213
    %v216 = vmul.u32 %v214, 2221713035
    %v217 = vmul.u32 %v215, 2221713035
    %v218 = vshrl.u32 %v216, 16
    %v219 = vshrl.u32 %v217, 16
    %v220 = vxor.u32 %v216, %v218
    %v221 = vxor.u32 %v217, %v219
    %v222 = vsel %vm123, %v193, -inf
    %v223 = vsel %vm123, %v194, -inf
    %v224 = vmax.f32 %v222, %v223
    %225 = vmax.xlane.f32.xlu0 %v224
    %v226 = vpop.xlane.xlu0 %225
    %v227 = vrot.slane %v226, 4
    %v228 = vmax.f32 %v226, %v227
    %v229 = vrot.slane %v228, 2
    %v230 = vmax.f32 %v228, %v229
    %v231 = vrot.slane %v230, 1
    %v232 = vmax.f32 %v230, %v231
    %s233 = vtos %v232
    %v234 = vstv %s233
    %v235 = vrsqrt.pop %v234
    %v236 = vmul.f32 %v235, %v234
    %v237 = vmul.f32 %v236, %v235
    %v238 = vmul.f32 0.5, %v237
    %v239 = vsub.f32 1.5, %v238
    %v240 = vmul.f32 %v235, %v239
    %v241 = vmul.f32 %v234, %v240
    %vm242 = vcmp.eq.f32.partialorder %v234, inf
    %v243 = vsel %vm242, %v234, %v241
    %vm244 = vcmp.eq.f32.partialorder %v234, 0.0
    %v245 = vand.u32 %v234, 2147483648
    %v246 = vsel %vm244, %v245, %v243
    %s247 = vtos %v246
    %s248 = smul.f32 %s247, 5.0
    %s249 = sadd.f32 %s233, %s248
    %s250 = sadd.f32 %s249, 8.0
    %s251 = sceil.f32 %s250
    %s252 = smin.f32 %s251, 128.0
    %s253 = scvt.f32.s32.to.zero.pseudo %s252
    %v254 = vsub.f32 0.0, %v193
    %v255 = vsub.f32 0.0, %v194
    %v256 = vmul.f32 %v254, 1.442695
    %v257 = vpow.pop %v256
    %v258 = vmul.f32 %v255, 1.442695
    %v259 = vpow.pop %v258
    // While loop
    $region26: #{tpu_custom_call.1} parent=1 // loop_pre_header
      _
    $region27: #{tpu_custom_call.1} parent=1 // loop_header
      %s261 = sphi 0, %s263
      %p262 = scmp.ge.s32.totalorder %s261, %s253
      %v266 = vphi 1.0, %v308
      %v267 = vphi 1.0, %v309
      %v268 = vphi 0.0, %v314
      %v269 = vphi 0.0, %v315
    $region28: #{tpu_custom_call.1} parent=1 // loop_header_branch
      %265 = sbr.rel (%p262) target = $region32
    $region29: #{tpu_custom_call.1} parent=1 // loop_body
      %s270 = smul.u32 %s261, 2654435769
      %s271 = sadd.s32 %s270, 1663821211
      %s272 = sxor.u32 %s47, %s271
      %s273 = sshrl.u32 %s272, 16
      %s274 = sxor.u32 %s272, %s273
      %s275 = smul.u32 %s274, 2146121005
      %s276 = sshrl.u32 %s275, 15
      %s277 = sxor.u32 %s275, %s276
      %s278 = smul.u32 %s277, 2221713035
      %s279 = sshrl.u32 %s278, 16
      %s280 = sxor.u32 %s278, %s279
      %v281 = vstv %s280
      %v282 = vxor.u32 %v220, %v281
      %v283 = vxor.u32 %v221, %v281
      %v284 = vshrl.u32 %v282, 16
      %v285 = vshrl.u32 %v283, 16
      %v286 = vxor.u32 %v282, %v284
      %v287 = vxor.u32 %v283, %v285
      %v288 = vmul.u32 %v286, 2146121005
      %v289 = vmul.u32 %v287, 2146121005
      %v290 = vshrl.u32 %v288, 15
      %v291 = vshrl.u32 %v289, 15
      %v292 = vxor.u32 %v288, %v290
      %v293 = vxor.u32 %v289, %v291
      %v294 = vmul.u32 %v292, 2221713035
      %v295 = vmul.u32 %v293, 2221713035
      %v296 = vshrl.u32 %v294, 16
      %v297 = vshrl.u32 %v295, 16
      %v298 = vxor.u32 %v294, %v296
      %v299 = vxor.u32 %v295, %v297
      %v300 = vshrl.u32 %v298, 9
      %v301 = vshrl.u32 %v299, 9
      %v302 = vor.u32 %v300, 1065353216
      %v303 = vor.u32 %v301, 1065353216
      %v306 = vsub.f32 %v302, 1.0
      %v307 = vsub.f32 %v303, 1.0
      %v308 = vmul.f32 %v266, %v306
      %v309 = vmul.f32 %v267, %v307
      %vm310 = vcmp.gt.f32.partialorder %v308, %v257
      %vm311 = vcmp.gt.f32.partialorder %v309, %v259
      %v312 = vadd.f32 %v268, 1.0
      %v313 = vadd.f32 %v269, 1.0
      %v314 = vsel %vm310, %v312, %v268
      %v315 = vsel %vm311, %v313, %v269
    $region30: #{tpu_custom_call.1} parent=1 // loop_footer
      %s263 = sadd.s32 %s261, 1
    $region31: #{tpu_custom_call.1} parent=1 // loop_footer_branch
      %260 = sbr.rel target = $region27
    $region32: #{tpu_custom_call.1} parent=1 // loop_exit
      _
    %v316 = vld [vmem:[#allocation6] sm:$0xf]
    %317 = vset.pattern.permute.xlu0 8
    %318 = vperm.xlu0 %317, %v48
    %v319 = vpop.permute.xlu0 %318
    %322 = vst [vmem:[#allocation1] ss:$4 sm:$0xff] %v316
    %v323 = vld.sshfl [vmem:[#allocation1] sm:$0xff pattern:$0x73625140]
    %v324 = vld.sshfl [vmem:[#allocation1 + $0x8] sm:$0xff pattern:$0x73625140]
    %v327 = vmul.f32 %v319, %v323
    %v328 = vmul.f32 %v319, %v324
    %329 = vset.pattern.permute.xlu0 7
    %330 = vperm.xlu0 %329, %v48
    %v331 = vpop.permute.xlu0 %330
    %v333 = vadd.f32 %v331, %v327
    %v334 = vadd.f32 %v331, %v328
    %v335 = vadd.f32 %v268, %v333
    %v336 = vadd.f32 %v269, %v334
    %v337 = vmax.f32 %v335, 0.0
    %v338 = vmax.f32 %v336, 0.0
    %v341 = vrot.slane %v338, 6
    %v342 = vsel %vm123, %v337, %v341
    %344 = vst [vmem:[#allocation8] sm:$0xf] %v342
    // Predicated region
    $region33: #{tpu_custom_call.1} parent=1 // pred_check
      _
    $region34: #{tpu_custom_call.1} parent=1 // pred_check_branch
      %346 = sbr.rel (0) target = $region36
    $region35: #{tpu_custom_call.1} parent=1 // pred_region
      %348 = vsyncadd [#allocation5], 0
      %s350 = sshll.u32 [#allocation8], 4
      %s351 = int_to_ptr.vmem [resolvable:$true] %s350
      %s352 = sshll.u32 %s4, 4
      %s353 = int_to_ptr.hbm [resolvable:$true] %s352
      %355 = dma.vmem_to_hbm [thread:$0]  %s351, 64, %s353, [#allocation5]
    $region36: #{tpu_custom_call.1} parent=1 // pred_fallthru
      _
    // Predicated region
    $region37: #{tpu_custom_call.1} parent=1 // pred_check
      _
    $region38: #{tpu_custom_call.1} parent=1 // pred_check_branch
      %357 = sbr.rel (0) target = $region40
    $region39: #{tpu_custom_call.1} parent=1 // pred_region
      %359 = dma.done [#allocation5], 64
    $region40: #{tpu_custom_call.1} parent=1 // pred_fallthru
      _
    %360 = vsyncpa [#allocation4], 1
    %361 = vsyncpa [#allocation7], 1
    %362 = vsyncpa [#allocation5], 1

</llo_original>
